<compile_context>
chip_gen: v5e
topology: v5e:2x2
jax: 0.10.0
libtpu: 0.0.40
codegen_flags: <defaults>
</compile_context>

<pallas_src>
import jax
import jax.numpy as jnp
from jax import lax
from jax.experimental import pallas as pl
from jax.experimental.pallas import tpu as pltpu


def _round_up(x, m):
    return ((x + m - 1) // m) * m


# ----------------------------------------------------------------------------
# Pallas kernel: out = A @ W + bias   (bias broadcast over rows, f32 epilogue)
# ----------------------------------------------------------------------------
def _matmul_bias_kernel(a_ref, w_ref, b_ref, o_ref):
    acc = jnp.dot(a_ref[...], w_ref[...], preferred_element_type=jnp.float32)
    o_ref[...] = acc + b_ref[...]


def matmul_bias(a, w, b, *, tile_m=512):
    """a: (M, K) f32/bf16, w: (K, Np) same dtype (Np multiple of 128),
    b: (1, Np) f32.  Returns (M, Np) f32, computed on the MXU."""
    M, K = a.shape
    Kw, Np = w.shape
    assert K == Kw and Np % 128 == 0 and b.shape == (1, Np)

    if M <= tile_m:
        # Single full-extent block: block_shape == array dims satisfies the
        # (8,128) rule; Mosaic pads internally -> no activation-side padding.
        bm, Mp, a_in = M, M, a
    else:
        # Tile the row dimension so the working set fits VMEM and the
        # "parallel" grid axis shards across TensorCores (v7x has 2 per chip).
        bm = tile_m
        Mp = _round_up(M, bm)
        a_in = a if Mp == M else jnp.pad(a, ((0, Mp - M), (0, 0)))

    cost = pl.CostEstimate(
        flops=2 * Mp * K * Np,
        transcendentals=0,
        bytes_accessed=(Mp * K * a_in.dtype.itemsize
                        + K * Np * w.dtype.itemsize
                        + Np * 4
                        + Mp * Np * 4),
    )

    out = pl.pallas_call(
        _matmul_bias_kernel,
        out_shape=jax.ShapeDtypeStruct((Mp, Np), jnp.float32),
        grid=(Mp // bm,),
        in_specs=[
            pl.BlockSpec((bm, K), lambda i: (i, 0)),
            pl.BlockSpec((K, Np), lambda i: (0, 0)),
            pl.BlockSpec((1, Np), lambda i: (0, 0)),
        ],
        out_specs=pl.BlockSpec((bm, Np), lambda i: (i, 0)),
        compiler_params=pltpu.CompilerParams(
            dimension_semantics=("parallel",)),
        cost_estimate=cost,
    )(a_in, w, b)
    return out[:M]


# ----------------------------------------------------------------------------
# im2col via one fused XLA op (feature dim ordered (c, kh, kw) -> matches the
# PyTorch OIHW weight flattening).
# ----------------------------------------------------------------------------
def _extract_patches(x, kh, kw, stride, pad):
    """(N, C, H, W) -> ((N*Ho*Wo, C*kh*kw), Ho, Wo)."""
    n = x.shape[0]
    patches = lax.conv_general_dilated_patches(
        x, filter_shape=(kh, kw), window_strides=(stride, stride),
        padding=[(pad, pad), (pad, pad)],
        dimension_numbers=("NCHW", "OIHW", "NCHW"),
    )                                           # (N, C*kh*kw, Ho, Wo)
    feat, ho, wo = patches.shape[1], patches.shape[2], patches.shape[3]
    a = patches.transpose(0, 2, 3, 1).reshape(n * ho * wo, feat)
    return a, ho, wo


# ----------------------------------------------------------------------------
# Weight folding: front conv + identity SCNN + stride==kernel transpose conv
# collapse into one (300, 25) affine map.  Valid only while the path between
# the two convolutions stays affine (it is: SCNN.forward returns its input).
# ----------------------------------------------------------------------------
_KH = _KW = 10
_STRIDE = 5
_PAD = 3
_TK = 5  # transpose-conv kernel == stride


def _fold_params(params):
    wf = params["w_front"].astype(jnp.float32).reshape(48, -1)   # (48, 300)
    wb = params["w_back"].astype(jnp.float32).reshape(48, -1)    # (48, 25)
    w_comb = wf.T @ wb                                           # (300, 25)
    b_comb = (params["b_front"].astype(jnp.float32) @ wb
              + params["b_back"].astype(jnp.float32))            # (25,)
    return w_comb, b_comb


# ----------------------------------------------------------------------------
# Full SCNN_Net forward
# ----------------------------------------------------------------------------
def scnn_net_forward(x, params, compute_dtype=jnp.float32):
    """x: (N, 3, H, W) NCHW -> (N, 1, 5*Ho, 5*Wo) NCHW."""
    n = x.shape[0]
    a, ho, wo = _extract_patches(x, _KH, _KW, _STRIDE, _PAD)      # (M, 300)

    w_comb, b_comb = _fold_params(params)
    n_out = w_comb.shape[1]                                       # 25
    n_pad = _round_up(max(n_out, 128), 128)                       # lane-dense
    # Pad only the tiny weight/bias to a 128-lane output slab (dense vst),
    # never the activation path.
    w_pad = (jnp.zeros((w_comb.shape[0], n_pad), jnp.float32)
             .at[:, :n_out].set(w_comb).astype(compute_dtype))
    b_pad = jnp.zeros((1, n_pad), jnp.float32).at[0, :n_out].set(b_comb)

    # TODO(synk): the SCNN layer's four 48->48 directional convs never affect
    # the output (its forward returns the input unchanged), so they are not
    # materialized here.
    out = matmul_bias(a.astype(compute_dtype), w_pad, b_pad)[:, :n_out]

    # Scatter each disjoint 5x5 patch into the NCHW output canvas.
    out = out.reshape(n, ho, wo, 1, _TK, _TK).transpose(0, 3, 1, 4, 2, 5)
    return out.reshape(n, 1, _TK * ho, _TK * wo)


if __name__ == "__main__":
    key = jax.random.PRNGKey(0)
    k1, k2, k3, k4, kx = jax.random.split(key, 5)

    # Deterministic synthetic parameters (shapes from the module __init__).
    params = {
        "w_front": 0.05 * jax.random.normal(k1, (48, 3, 10, 10), jnp.float32),
        "b_front": 0.05 * jax.random.normal(k2, (48,), jnp.float32),
        "w_back": 0.05 * jax.random.normal(k3, (48, 1, 5, 5), jnp.float32),
        "b_back": 0.05 * jax.random.normal(k4, (1,), jnp.float32),
    }
    x = jax.random.normal(kx, (2, 3, 16, 16), jnp.float32)  # NCHW

    fwd = jax.jit(scnn_net_forward)
    out = jax.block_until_ready(fwd(x, params))
    assert out.shape == (2, 1, 15, 15), out.shape

    # ----- reference check (pure JAX / lax, fully vectorized) --------------
    ref1 = lax.conv_general_dilated(
        x, params["w_front"], window_strides=(5, 5),
        padding=[(3, 3), (3, 3)],
        dimension_numbers=("NCHW", "OIHW", "NCHW"),
    ) + params["b_front"].reshape(1, 48, 1, 1)                # (N,48,Ho,Wo)

    n_b, _, Ho, Wo = ref1.shape
    # Stride == kernel transpose conv: each input pixel writes a disjoint
    # 5x5 output patch; one einsum + reshape reproduces it exactly.
    ref2 = jnp.einsum("nchw,cokl->nohkwl", ref1, params["w_back"])
    ref2 = ref2.reshape(n_b, 1, 5 * Ho, 5 * Wo) + params["b_back"].reshape(1, 1, 1, 1)

    assert jnp.allclose(out, ref2, atol=2e-4, rtol=1e-3), (
        float(jnp.max(jnp.abs(out - ref2))))

    # bf16 inputs / f32 accumulation variant (MXU-peak path at scale).
    fwd_bf16 = jax.jit(
        lambda xx, pp: scnn_net_forward(xx, pp, compute_dtype=jnp.bfloat16))
    out_bf16 = jax.block_until_ready(fwd_bf16(x, params))
    assert out_bf16.shape == (2, 1, 15, 15)
    assert jnp.allclose(out_bf16, ref2, atol=5e-2, rtol=5e-2), (
        float(jnp.max(jnp.abs(out_bf16 - ref2))))

    print("KERNEL_OK")
</pallas_src>

<mosaic_0001>
module attributes {stable_mosaic.version = 11 : i64} {
  func.func @_matmul_bias_kernel(%arg0: i32, %arg1: memref<18x300xf32, #tpu.memory_space<vmem>>, %arg2: memref<300x128xf32, #tpu.memory_space<vmem>>, %arg3: memref<1x128xf32, #tpu.memory_space<vmem>>, %arg4: memref<18x128xf32, #tpu.memory_space<vmem>>) attributes {dimension_semantics = [#tpu.dimension_semantics<parallel>], iteration_bounds = array<i64: 1>, scalar_prefetch = 0 : i64, scratch_operands = 0 : i64, tpu.core_type = #tpu.core_type<tc>, window_params = [{transform_indices = @transform_0, window_bounds = array<i64: 18, 300>}, {pipeline_mode = #tpu.pipeline_mode<synchronous>, transform_indices = @transform_1, window_bounds = array<i64: 300, 128>}, {pipeline_mode = #tpu.pipeline_mode<synchronous>, transform_indices = @transform_2, window_bounds = array<i64: 1, 128>}, {transform_indices = @transform_3, window_bounds = array<i64: 18, 128>}]} {
    %c0 = arith.constant 0 : index
    %c0_0 = arith.constant 0 : index
    %0 = vector.load %arg1[%c0, %c0_0] : memref<18x300xf32, #tpu.memory_space<vmem>>, vector<18x300xf32>
    %c0_1 = arith.constant 0 : index
    %c0_2 = arith.constant 0 : index
    %1 = vector.load %arg2[%c0_1, %c0_2] : memref<300x128xf32, #tpu.memory_space<vmem>>, vector<300x128xf32>
    %cst = arith.constant dense<0.000000e+00> : vector<18x128xf32>
    %2 = tpu.matmul %0, %1, %cst {dimension_numbers = #tpu.dot_dimension_numbers<[1], [0], [0], [1], [0, 0, 1, 1], [], []>} : vector<18x300xf32>, vector<300x128xf32>, vector<18x128xf32> -> vector<18x128xf32>
    %c0_3 = arith.constant 0 : index
    %c0_4 = arith.constant 0 : index
    %3 = vector.load %arg3[%c0_3, %c0_4] : memref<1x128xf32, #tpu.memory_space<vmem>>, vector<1x128xf32>
    %4 = vector.broadcast %3 : vector<1x128xf32> to vector<18x128xf32>
    %5 = arith.addf %2, %4 : vector<18x128xf32>
    %c0_5 = arith.constant 0 : index
    %c0_6 = arith.constant 0 : index
    %6 = vector.load %arg4[%c0_5, %c0_6] : memref<18x128xf32, #tpu.memory_space<vmem>>, vector<18x128xf32>
    tpu.vector_store %arg4[%c0_5, %c0_6], %5 {strides = array<i32>} : memref<18x128xf32, #tpu.memory_space<vmem>>, vector<18x128xf32>,
    return
  }
  func.func @transform_0(%arg0: i32) -> (i32, i32) {
    %c0_i32 = arith.constant 0 : i32
    %c0_i32_0 = arith.constant 0 : i32
    return %arg0, %c0_i32 : i32, i32
  }
  func.func @transform_1(%arg0: i32) -> (i32, i32) {
    %c0_i32 = arith.constant 0 : i32
    %c0_i32_0 = arith.constant 0 : i32
    %c0_i32_1 = arith.constant 0 : i32
    return %c0_i32, %c0_i32_0 : i32, i32
  }
  func.func @transform_2(%arg0: i32) -> (i32, i32) {
    %c0_i32 = arith.constant 0 : i32
    %c0_i32_0 = arith.constant 0 : i32
    %c0_i32_1 = arith.constant 0 : i32
    return %c0_i32, %c0_i32_0 : i32, i32
  }
  func.func @transform_3(%arg0: i32) -> (i32, i32) {
    %c0_i32 = arith.constant 0 : i32
    %c0_i32_0 = arith.constant 0 : i32
    return %arg0, %c0_i32 : i32, i32
  }
}

</mosaic_0001>

<llo_original>
// kernel: scnn_net_forward.1
$region0: #{scnn_net_forward.1}
  #allocation0 [shape = 'u32[]', space=smem, size = 0x4, offset = 0x4, fixed_abs, tag = 'smem constant byte address 0x4 - core index']
  #allocation1 [shape = 'u32[72,128]{1,0:T(1,128)}', space=vmem, size = 0x9000, scoped, tag = 'internal scratch']
  %s0 = inlined_call_operand.vmem [shape: f32[18,300], index: 0, kind: input, shape index: {}]
  %s1 = inlined_call_operand.vmem [shape: f32[300,128], index: 1, kind: input, shape index: {}]
  %s2 = inlined_call_operand.vmem [shape: f32[1,128], index: 2, kind: input, shape index: {}]
  %s3 = inlined_call_operand.vmem [shape: f32[18,128], index: 3, kind: output, shape index: {}]
  %s4 = sld [smem:[#allocation0]]
  $region22: #{scnn_net_forward.1} parent=0
    _
  %s6 = ssub.s32 1, %s4
  %s7 = scalar_select 0, %s6, %s4
  // Predicated region
  $region2: #{scnn_net_forward.1} parent=0 // pred_check
    _
  $region3: #{scnn_net_forward.1} parent=0 // pred_check_branch
    %9 = sbr.rel (0) target = $region5
  $region4: #{scnn_net_forward.1} parent=0 // pred_region
    _
  $region5: #{scnn_net_forward.1} parent=0 // pred_fallthru
    _
  // Predicated region
  $region6: #{scnn_net_forward.1} parent=0 // pred_check
    _
  $region7: #{scnn_net_forward.1} parent=0 // pred_check_branch
    %11 = sbr.rel (0) target = $region9
  $region8: #{scnn_net_forward.1} parent=0 // pred_region
    _
  $region9: #{scnn_net_forward.1} parent=0 // pred_fallthru
    _
  // Predicated region
  $region10: #{scnn_net_forward.1} parent=0 // pred_check
    _
  $region11: #{scnn_net_forward.1} parent=0 // pred_check_branch
    %13 = sbr.rel (0) target = $region13
  $region12: #{scnn_net_forward.1} parent=0 // pred_region
    _
  $region13: #{scnn_net_forward.1} parent=0 // pred_fallthru
    _
  %v14 = vld [vmem:[%s0] sm:$0xff]
  %v15 = vld [vmem:[%s0 + $0x8] sm:$0xff]
  %v16 = vld [vmem:[%s0 + $0x10] sm:$0xff]
  %v17 = vld [vmem:[%s0 + $0x18] sm:$0xff]
  %v18 = vld [vmem:[%s0 + $0x20] sm:$0xff]
  %v19 = vld [vmem:[%s0 + $0x28] sm:$0xff]
  %v20 = vld [vmem:[%s0 + $0x30] sm:$0x3]
  %v21 = vld [vmem:[%s0 + $0x38] sm:$0x3]
  %v22 = vld [vmem:[%s0 + $0x40] sm:$0x3]
  %v23 = vld [vmem:[%s1] sm:$0xff]
  %v24 = vld [vmem:[%s1 + $0x8] sm:$0xff]
  %v25 = vld [vmem:[%s1 + $0x10] sm:$0xff]
  %v26 = vld [vmem:[%s1 + $0x18] sm:$0xff]
  %v27 = vld [vmem:[%s1 + $0x20] sm:$0xff]
  %v28 = vld [vmem:[%s1 + $0x28] sm:$0xff]
  %v29 = vld [vmem:[%s1 + $0x30] sm:$0xff]
  %v30 = vld [vmem:[%s1 + $0x38] sm:$0xff]
  %v31 = vld [vmem:[%s1 + $0x40] sm:$0xff]
  %v32 = vld [vmem:[%s1 + $0x48] sm:$0xff]
  %v33 = vld [vmem:[%s1 + $0x50] sm:$0xff]
  %v34 = vld [vmem:[%s1 + $0x58] sm:$0xff]
  %v35 = vld [vmem:[%s1 + $0x60] sm:$0xff]
  %v36 = vld [vmem:[%s1 + $0x68] sm:$0xff]
  %v37 = vld [vmem:[%s1 + $0x70] sm:$0xff]
  %v38 = vld [vmem:[%s1 + $0x78] sm:$0xff]
  %v39 = vld [vmem:[%s1 + $0x80] sm:$0xff]
  %v40 = vld [vmem:[%s1 + $0x88] sm:$0xff]
  %v41 = vld [vmem:[%s1 + $0x90] sm:$0xff]
  %v42 = vld [vmem:[%s1 + $0x98] sm:$0xff]
  %v43 = vld [vmem:[%s1 + $0xa0] sm:$0xff]
  %v44 = vld [vmem:[%s1 + $0xa8] sm:$0xff]
  %v45 = vld [vmem:[%s1 + $0xb0] sm:$0xff]
  %v46 = vld [vmem:[%s1 + $0xb8] sm:$0xff]
  %v47 = vld [vmem:[%s1 + $0xc0] sm:$0xff]
  %v48 = vld [vmem:[%s1 + $0xc8] sm:$0xff]
  %v49 = vld [vmem:[%s1 + $0xd0] sm:$0xff]
  %v50 = vld [vmem:[%s1 + $0xd8] sm:$0xff]
  %v51 = vld [vmem:[%s1 + $0xe0] sm:$0xff]
  %v52 = vld [vmem:[%s1 + $0xe8] sm:$0xff]
  %v53 = vld [vmem:[%s1 + $0xf0] sm:$0xff]
  %v54 = vld [vmem:[%s1 + $0xf8] sm:$0xff]
  %v55 = vld [vmem:[%s1 + $0x100] sm:$0xff]
  %v56 = vld [vmem:[%s1 + $0x108] sm:$0xff]
  %v57 = vld [vmem:[%s1 + $0x110] sm:$0xff]
  %v58 = vld [vmem:[%s1 + $0x118] sm:$0xff]
  %v59 = vld [vmem:[%s1 + $0x120] sm:$0xff]
  %v60 = vld [vmem:[%s1 + $0x128] sm:$0xf]
  %v61 = vld [vmem:[%s2] sm:$0x1]
  %v63 = vperm.slane %v61, 0
  %vm65 = vcmask 359424
  %v67 = vsel %vm65, %v16, 0
  %v70 = vsel %vm65, %v19, 0
  %v73 = vsel %vm65, %v22, 0
  %vm75 = vcmask 1043456
  %v77 = vsel %vm75, %v60, 0
  %79 = vmatpush.msra.mxu0 %v38
  %80 = vmatpush.msra.mxu0 %v37
  %81 = vmatpush.msra.mxu0 %v36
  %82 = vmatpush.msra.mxu0 %v35
  %83 = vmatpush.msra.mxu0 %v34
  %84 = vmatpush.msra.mxu0 %v33
  %85 = vmatpush.msra.mxu0 %v32
  %86 = vmatpush.msra.mxu0 %v31
  %87 = vmatpush.msra.mxu0 %v30
  %88 = vmatpush.msra.mxu0 %v29
  %89 = vmatpush.msra.mxu0 %v28
  %90 = vmatpush.msra.mxu0 %v27
  %91 = vmatpush.msra.mxu0 %v26
  %92 = vmatpush.msra.mxu0 %v25
  %93 = vmatpush.msra.mxu0 %v24
  %94 = vmatpush.msra.mxu0 %v23
  %95 = vmatmul.f32.gmra.mxu0 %v14
  %v96 = vpop.f32.mrf.mxu0
  %v97 = vadd.f32 %v63, %v96
  %98 = vmatmul.f32.gmra.mxu0 %v17
  %v99 = vpop.f32.mrf.mxu0
  %v100 = vadd.f32 %v63, %v99
  %101 = vmatmul.f32.gmra.mxu0 %v20
  %v102 = vpop.f32.mrf.mxu0
  %v103 = vadd.f32 %v63, %v102
  %104 = vdwg.mxu0
  %105 = vmatpush.msra.mxu0 %v54
  %106 = vmatpush.msra.mxu0 %v53
  %107 = vmatpush.msra.mxu0 %v52
  %108 = vmatpush.msra.mxu0 %v51
  %109 = vmatpush.msra.mxu0 %v50
  %110 = vmatpush.msra.mxu0 %v49
  %111 = vmatpush.msra.mxu0 %v48
  %112 = vmatpush.msra.mxu0 %v47
  %113 = vmatpush.msra.mxu0 %v46
  %114 = vmatpush.msra.mxu0 %v45
  %115 = vmatpush.msra.mxu0 %v44
  %116 = vmatpush.msra.mxu0 %v43
  %117 = vmatpush.msra.mxu0 %v42
  %118 = vmatpush.msra.mxu0 %v41
  %119 = vmatpush.msra.mxu0 %v40
  %120 = vmatpush.msra.mxu0 %v39
  %121 = vmatmul.f32.gmra.mxu0 %v15
  %v122 = vpop.f32.mrf.mxu0
  %v123 = vadd.f32 %v97, %v122
  %124 = vmatmul.f32.gmra.mxu0 %v18
  %v125 = vpop.f32.mrf.mxu0
  %v126 = vadd.f32 %v100, %v125
  %127 = vmatmul.f32.gmra.mxu0 %v21
  %v128 = vpop.f32.mrf.mxu0
  %v129 = vadd.f32 %v103, %v128
  %130 = vdwg.mxu0
  %131 = vmatpush.msra.mxu0 0.0
  %132 = vmatpush.msra.mxu0 0.0
  %133 = vmatpush.msra.mxu0 0.0
  %134 = vmatpush.msra.mxu0 0.0
  %135 = vmatpush.msra.mxu0 0.0
  %136 = vmatpush.msra.mxu0 0.0
  %137 = vmatpush.msra.mxu0 0.0
  %138 = vmatpush.msra.mxu0 0.0
  %139 = vmatpush.msra.mxu0 0.0
  %140 = vmatpush.msra.mxu0 0.0
  %141 = vmatpush.msra.mxu0 %v77
  %142 = vmatpush.msra.mxu0 %v59
  %143 = vmatpush.msra.mxu0 %v58
  %144 = vmatpush.msra.mxu0 %v57
  %145 = vmatpush.msra.mxu0 %v56
  %146 = vmatpush.msra.mxu0 %v55
  %147 = vmatmul.f32.gmra.mxu0 %v67
  %v148 = vpop.f32.mrf.mxu0
  %v149 = vadd.f32 %v123, %v148
  %150 = vmatmul.f32.gmra.mxu0 %v70
  %v151 = vpop.f32.mrf.mxu0
  %v152 = vadd.f32 %v126, %v151
  %153 = vmatmul.f32.gmra.mxu0 %v73
  %v154 = vpop.f32.mrf.mxu0
  %v155 = vadd.f32 %v129, %v154
  %156 = vdwg.mxu0
  %157 = vst [vmem:[%s3] sm:$0xff] %v149
  %158 = vst [vmem:[%s3 + $0x8] sm:$0xff] %v152
  %159 = vst [vmem:[%s3 + $0x10] sm:$0x3] %v155
  // Predicated region
  $region14: #{scnn_net_forward.1} parent=0 // pred_check
    _
  $region15: #{scnn_net_forward.1} parent=0 // pred_check_branch
    %161 = sbr.rel (0) target = $region17
  $region16: #{scnn_net_forward.1} parent=0 // pred_region
    _
  $region17: #{scnn_net_forward.1} parent=0 // pred_fallthru
    _
  // Predicated region
  $region18: #{scnn_net_forward.1} parent=0 // pred_check
    _
  $region19: #{scnn_net_forward.1} parent=0 // pred_check_branch
    %163 = sbr.rel (0) target = $region21
  $region20: #{scnn_net_forward.1} parent=0 // pred_region
    _
  $region21: #{scnn_net_forward.1} parent=0 // pred_fallthru
    _

</llo_original>
